<compile_context>
chip_gen: v5e
topology: v5e:2x2
jax: 0.10.0
libtpu: 0.0.40
codegen_flags: <defaults>
</compile_context>

<pallas_src>
import jax
import jax.numpy as jnp
from jax.experimental import pallas as pl
from jax.experimental.pallas import tpu as pltpu


def _round_up(v, m):
    return (v + m - 1) // m * m


def _prior_ce_kernel(log_prior_ref, x_ref, y_ref, out_ref,
                     acc_tgt_ref, acc_logz_ref):
    # log_prior_ref: (1, C)       f32  VMEM, resident across all grid steps
    # x_ref:         (TILE_N, C)  x dtype (cast to f32 in-kernel)
    # y_ref:         (TILE_N, 1)  i32  (rows padded with -1 contribute 0)
    # out_ref:       (8, 128)     f32  per-core partial (broadcast scalar)
    # acc_tgt_ref:   (1, C)       f32  running per-lane sums of target logits
    # acc_logz_ref:  (1, 1)       f32  running sum of per-row logZ
    i = pl.program_id(1)

    @pl.when(i == 0)
    def _():
        acc_tgt_ref[...] = jnp.zeros_like(acc_tgt_ref)
        acc_logz_ref[...] = jnp.zeros_like(acc_logz_ref)

    x = x_ref[...].astype(jnp.float32)                 # (T, C)
    logits = x + log_prior_ref[...]                    # broadcast (1, C)

    y = y_ref[...]                                     # (T, 1) int32
    valid = y >= 0                                     # padded / garbage rows -> False

    # Row-wise logZ (numerically stable).  Garbage rows of a partial last
    # block may be NaN/Inf, but the jnp.where *select* below blocks
    # propagation — keep it a select, never a multiply.
    m = jnp.max(logits, axis=-1, keepdims=True)        # (T, 1)
    lse = jnp.log(jnp.sum(jnp.exp(logits - m), axis=-1, keepdims=True))
    logz = jnp.where(valid, m + lse, 0.0)              # (T, 1)

    # Target logit via iota one-hot mask (no dynamic gather on TPU).
    class_ids = jax.lax.broadcasted_iota(jnp.int32, logits.shape, 1)
    tgt = jnp.where(class_ids == y, logits, 0.0)       # (T, C)

    # Accumulate along sublanes only (cheap vreg tree-adds); the cross-lane
    # reduction of acc_tgt is deferred to the finalize step.
    acc_tgt_ref[...] += jnp.sum(tgt, axis=0, keepdims=True)      # (1, C)
    acc_logz_ref[...] += jnp.sum(logz, axis=0, keepdims=True)    # (1, 1)

    @pl.when(i == pl.num_programs(1) - 1)
    def _():
        # per-core partial of (sum logZ - sum target_logit); broadcast into a
        # full lane-dense (8,128) block so the writeback is an unmasked store.
        partial = acc_logz_ref[...] - jnp.sum(acc_tgt_ref[...], keepdims=True)
        out_ref[...] = jnp.broadcast_to(partial, out_ref.shape)


def _choose_tile_n(n, c, itemsize, vmem_budget_bytes=16 << 20, max_tile=32768):
    """Pick a batch-tile size from a VMEM working-set budget."""
    c_pad = _round_up(c, 128)
    # per-row VMEM bytes: x double-buffered in its HBM dtype, ~4 live f32
    # temporaries (cast / logits / exp / one-hot), y double-buffered and
    # lane-padded to 128 (cost of the (tile_n, 1) column block, budgeted here).
    per_row = 2 * c_pad * itemsize + 4 * c_pad * 4 + 2 * 128 * 4
    pack = {1: 32, 2: 16, 4: 8}.get(itemsize, 8)       # sublane packing / dtype
    tile = (vmem_budget_bytes // per_row) // pack * pack
    tile = max(pack, min(tile, max_tile, _round_up(n, pack)))
    return tile, pack


def prior_ce_loss(x, y, prior, *, tile_n=None, num_splits=2):
    """x: (N, C) f32/bf16 logits, y: (N,) int labels, prior: (C,) -> f32 loss."""
    N, C = x.shape
    itemsize = x.dtype.itemsize

    # hoisted once per call; stays VMEM-resident across every grid step
    log_prior = jnp.log(prior.astype(jnp.float32) + 1e-9).reshape(1, C)

    auto_tile, pack = _choose_tile_n(N, C, itemsize)
    if tile_n is None:
        tile_n = auto_tile
    else:
        tile_n = max(pack, min(_round_up(tile_n, pack), _round_up(N, pack)))

    n_tiles = pl.cdiv(N, tile_n)
    num_splits = max(1, min(num_splits, n_tiles))      # dual-TC on v7x; free elsewhere
    tiles_per_split = pl.cdiv(n_tiles, num_splits)
    n_pad = num_splits * tiles_per_split * tile_n

    # Only y is padded (tiny); x streams unpadded.  Padded rows carry class -1
    # so they contribute exactly 0 inside the kernel.
    y1 = y.reshape(N).astype(jnp.int32)
    if n_pad != N:
        y1 = jnp.pad(y1, (0, n_pad - N), constant_values=-1)
    y2 = y1.reshape(n_pad, 1)

    last_block = n_tiles - 1

    def x_map(c, i):
        # clamp fully-out-of-bounds blocks of the core split onto the last
        # valid block; their y rows are all -1 so they contribute 0.
        return (jnp.minimum(c * tiles_per_split + i, last_block), 0)

    def y_map(c, i):
        return (c * tiles_per_split + i, 0)

    cost = pl.CostEstimate(
        flops=6 * N * C,
        transcendentals=N * C + 2 * N,
        bytes_accessed=N * C * itemsize + n_pad * 4 + C * 4 + num_splits * 8 * 128 * 4,
    )

    out = pl.pallas_call(
        _prior_ce_kernel,
        out_shape=jax.ShapeDtypeStruct((num_splits * 8, 128), jnp.float32),
        grid=(num_splits, tiles_per_split),
        in_specs=[
            pl.BlockSpec((1, C), lambda c, i: (0, 0)),       # log_prior, resident
            pl.BlockSpec((tile_n, C), x_map),                # x tile (unpadded HBM)
            pl.BlockSpec((tile_n, 1), y_map),                # y tile (padded with -1)
        ],
        out_specs=pl.BlockSpec((8, 128), lambda c, i: (c, 0)),  # per-core partial
        scratch_shapes=[
            pltpu.VMEM((1, C), jnp.float32),                 # acc_tgt (lane partials)
            pltpu.VMEM((1, 1), jnp.float32),                 # acc_logz
        ],
        compiler_params=pltpu.CompilerParams(
            dimension_semantics=("parallel", "arbitrary"),
            vmem_limit_bytes=32 * 1024 * 1024,
        ),
        cost_estimate=cost,
    )(log_prior, x, y2)

    # loss = (sum logZ - sum target_logit) / N, combining per-core partials
    partials = out[::8, 0]                               # one value per core split
    return jnp.sum(partials) * (1.0 / N)


def _reference_loss(x, y, prior):
    logits = x.astype(jnp.float32) + jnp.log(prior.astype(jnp.float32) + 1e-9)[None, :]
    logp = jax.nn.log_softmax(logits, axis=-1)
    return -jnp.mean(logp[jnp.arange(x.shape[0]), y])


if __name__ == "__main__":
    key = jax.random.PRNGKey(0)
    N, C = 8, 16  # batch, num_classes

    # Deterministic imbalanced "num_per_class", as in __init__.
    num_per_class = jnp.arange(1, C + 1, dtype=jnp.float32) * 10.0
    prior = num_per_class / jnp.sum(num_per_class)

    kx, ky = jax.random.split(key)
    x = jax.random.normal(kx, (N, C), dtype=jnp.float32)
    y = jax.random.randint(ky, (N,), 0, C, dtype=jnp.int32)

    # single-tile case
    loss = prior_ce_loss(x, y, prior)
    jax.block_until_ready(loss)
    loss_ref = _reference_loss(x, y, prior)
    assert jnp.allclose(loss, loss_ref, atol=1e-5, rtol=1e-5), (loss, loss_ref)

    # ragged multi-tile case: exercises the dual-core split, the clamped x
    # index_map, the y==-1 masking of the unpadded x tail, and the accumulators.
    N2 = 20
    kx2, ky2 = jax.random.split(jax.random.PRNGKey(1))
    x2 = jax.random.normal(kx2, (N2, C), dtype=jnp.float32)
    y2 = jax.random.randint(ky2, (N2,), 0, C, dtype=jnp.int32)
    loss2 = prior_ce_loss(x2, y2, prior, tile_n=8)
    jax.block_until_ready(loss2)
    loss2_ref = _reference_loss(x2, y2, prior)
    assert jnp.allclose(loss2, loss2_ref, atol=1e-5, rtol=1e-5), (loss2, loss2_ref)

    # bf16 fast path (16-row sublane packing, overhanging tail block masked)
    x3 = x2.astype(jnp.bfloat16)
    loss3 = prior_ce_loss(x3, y2, prior)
    jax.block_until_ready(loss3)
    loss3_ref = _reference_loss(x3, y2, prior)
    assert jnp.allclose(loss3, loss3_ref, atol=1e-5, rtol=1e-5), (loss3, loss3_ref)

    print("KERNEL_OK")
</pallas_src>

<mosaic_0001>
module attributes {stable_mosaic.version = 11 : i64} {
  func.func @_prior_ce_kernel(%arg0: i32, %arg1: i32, %arg2: memref<1x16xf32, #tpu.memory_space<vmem>>, %arg3: memref<8x16xf32, #tpu.memory_space<vmem>>, %arg4: memref<8x1xi32, #tpu.memory_space<vmem>>, %arg5: memref<8x128xf32, #tpu.memory_space<vmem>>, %arg6: memref<1x16xf32, #tpu.memory_space<vmem>>, %arg7: memref<1x1xf32, #tpu.memory_space<vmem>>) attributes {dimension_semantics = [#tpu.dimension_semantics<parallel>, #tpu.dimension_semantics<arbitrary>], iteration_bounds = array<i64: 1, 1>, scalar_prefetch = 0 : i64, scratch_operands = 2 : i64, tpu.core_type = #tpu.core_type<tc>, window_params = [{pipeline_mode = #tpu.pipeline_mode<synchronous>, transform_indices = @transform_0, window_bounds = array<i64: 1, 16>}, {transform_indices = @transform_1, window_bounds = array<i64: 8, 16>}, {transform_indices = @transform_2, window_bounds = array<i64: 8, 1>}, {transform_indices = @transform_3, window_bounds = array<i64: 8, 128>}]} {
    %c0_i32 = arith.constant 0 : i32
    %0 = arith.cmpi eq, %arg1, %c0_i32 : i32
    %1 = arith.extui %0 : i1 to i32
    %c0_i32_0 = arith.constant 0 : i32
    %2 = arith.cmpi ne, %1, %c0_i32_0 : i32
    scf.if %2 {
      %cst_22 = arith.constant 0.000000e+00 : f32
      %39 = vector.broadcast %cst_22 : f32 to vector<1x16xf32>
      %c0_23 = arith.constant 0 : index
      %c0_24 = arith.constant 0 : index
      %40 = vector.load %arg6[%c0_23, %c0_24] : memref<1x16xf32, #tpu.memory_space<vmem>>, vector<1x16xf32>
      tpu.vector_store %arg6[%c0_23, %c0_24], %39 {strides = array<i32>} : memref<1x16xf32, #tpu.memory_space<vmem>>, vector<1x16xf32>,
      %cst_25 = arith.constant 0.000000e+00 : f32
      %41 = vector.broadcast %cst_25 : f32 to vector<1x1xf32>
      %c0_26 = arith.constant 0 : index
      %c0_27 = arith.constant 0 : index
      %42 = vector.load %arg7[%c0_26, %c0_27] : memref<1x1xf32, #tpu.memory_space<vmem>>, vector<1x1xf32>
      tpu.vector_store %arg7[%c0_26, %c0_27], %41 {strides = array<i32>} : memref<1x1xf32, #tpu.memory_space<vmem>>, vector<1x1xf32>,
    } else {
    }
    %c0 = arith.constant 0 : index
    %c0_1 = arith.constant 0 : index
    %3 = vector.load %arg3[%c0, %c0_1] : memref<8x16xf32, #tpu.memory_space<vmem>>, vector<8x16xf32>
    %c0_2 = arith.constant 0 : index
    %c0_3 = arith.constant 0 : index
    %4 = vector.load %arg2[%c0_2, %c0_3] : memref<1x16xf32, #tpu.memory_space<vmem>>, vector<1x16xf32>
    %5 = vector.broadcast %4 : vector<1x16xf32> to vector<8x16xf32>
    %6 = arith.addf %3, %5 : vector<8x16xf32>
    %c0_4 = arith.constant 0 : index
    %c0_5 = arith.constant 0 : index
    %7 = vector.load %arg4[%c0_4, %c0_5] : memref<8x1xi32, #tpu.memory_space<vmem>>, vector<8x1xi32>
    %c0_i32_6 = arith.constant 0 : i32
    %8 = vector.broadcast %c0_i32_6 : i32 to vector<8x1xi32>
    %9 = arith.cmpi sge, %7, %8 : vector<8x1xi32>
    %cst = arith.constant dense<0xFF800000> : vector<8xf32>
    %10 = vector.multi_reduction <maximumf>, %6, %cst [1] : vector<8x16xf32> to vector<8xf32>
    %11 = vector.shape_cast %10 : vector<8xf32> to vector<8x1xf32>
    %12 = vector.broadcast %11 : vector<8x1xf32> to vector<8x16xf32>
    %13 = arith.subf %6, %12 : vector<8x16xf32>
    %14 = math.exp %13 : vector<8x16xf32>
    %cst_7 = arith.constant dense<0.000000e+00> : vector<8xf32>
    %15 = vector.multi_reduction <add>, %14, %cst_7 [1] : vector<8x16xf32> to vector<8xf32>
    %16 = vector.shape_cast %15 : vector<8xf32> to vector<8x1xf32>
    %17 = math.log %16 : vector<8x1xf32>
    %18 = arith.addf %11, %17 : vector<8x1xf32>
    %cst_8 = arith.constant 0.000000e+00 : f32
    %19 = vector.broadcast %cst_8 : f32 to vector<8x1xf32>
    %20 = arith.select %9, %18, %19 : vector<8x1xi1>, vector<8x1xf32>
    %21 = tpu.iota {dimensions = array<i32: 1>} : vector<8x16xi32>
    %22 = vector.broadcast %7 : vector<8x1xi32> to vector<8x16xi32>
    %23 = arith.cmpi eq, %21, %22 : vector<8x16xi32>
    %cst_9 = arith.constant 0.000000e+00 : f32
    %24 = vector.broadcast %cst_9 : f32 to vector<8x16xf32>
    %25 = arith.select %23, %6, %24 : vector<8x16xi1>, vector<8x16xf32>
    %c0_10 = arith.constant 0 : index
    %c0_11 = arith.constant 0 : index
    %26 = vector.load %arg6[%c0_10, %c0_11] : memref<1x16xf32, #tpu.memory_space<vmem>>, vector<1x16xf32>
    %cst_12 = arith.constant dense<0.000000e+00> : vector<16xf32>
    %27 = vector.multi_reduction <add>, %25, %cst_12 [0] : vector<8x16xf32> to vector<16xf32>
    %28 = vector.shape_cast %27 : vector<16xf32> to vector<1x16xf32>
    %29 = arith.addf %26, %28 : vector<1x16xf32>
    %c0_13 = arith.constant 0 : index
    %c0_14 = arith.constant 0 : index
    %30 = vector.load %arg6[%c0_13, %c0_14] : memref<1x16xf32, #tpu.memory_space<vmem>>, vector<1x16xf32>
    tpu.vector_store %arg6[%c0_13, %c0_14], %29 {strides = array<i32>} : memref<1x16xf32, #tpu.memory_space<vmem>>, vector<1x16xf32>,
    %c0_15 = arith.constant 0 : index
    %c0_16 = arith.constant 0 : index
    %31 = vector.load %arg7[%c0_15, %c0_16] : memref<1x1xf32, #tpu.memory_space<vmem>>, vector<1x1xf32>
    %cst_17 = arith.constant dense<0.000000e+00> : vector<1xf32>
    %32 = vector.multi_reduction <add>, %20, %cst_17 [0] : vector<8x1xf32> to vector<1xf32>
    %33 = vector.shape_cast %32 : vector<1xf32> to vector<1x1xf32>
    %34 = arith.addf %31, %33 : vector<1x1xf32>
    %c0_18 = arith.constant 0 : index
    %c0_19 = arith.constant 0 : index
    %35 = vector.load %arg7[%c0_18, %c0_19] : memref<1x1xf32, #tpu.memory_space<vmem>>, vector<1x1xf32>
    tpu.vector_store %arg7[%c0_18, %c0_19], %34 {strides = array<i32>} : memref<1x1xf32, #tpu.memory_space<vmem>>, vector<1x1xf32>,
    %c0_i32_20 = arith.constant 0 : i32
    %36 = arith.cmpi eq, %arg1, %c0_i32_20 : i32
    %37 = arith.extui %36 : i1 to i32
    %c0_i32_21 = arith.constant 0 : i32
    %38 = arith.cmpi ne, %37, %c0_i32_21 : i32
    scf.if %38 {
      %c0_22 = arith.constant 0 : index
      %c0_23 = arith.constant 0 : index
      %39 = vector.load %arg7[%c0_22, %c0_23] : memref<1x1xf32, #tpu.memory_space<vmem>>, vector<1x1xf32>
      %c0_24 = arith.constant 0 : index
      %c0_25 = arith.constant 0 : index
      %40 = vector.load %arg6[%c0_24, %c0_25] : memref<1x16xf32, #tpu.memory_space<vmem>>, vector<1x16xf32>
      %41 = vector.shape_cast %40 : vector<1x16xf32> to vector<1x1x16xf32>
      %cst_26 = arith.constant dense<0.000000e+00> : vector<1xf32>
      %42 = vector.multi_reduction <add>, %41, %cst_26 [1, 2] : vector<1x1x16xf32> to vector<1xf32>
      %43 = vector.shape_cast %42 : vector<1xf32> to vector<1x1x1xf32>
      %44 = vector.extract %43[0, 0, 0] : f32 from vector<1x1x1xf32>
      %45 = vector.broadcast %44 : f32 to vector<1x1xf32>
      %46 = arith.subf %39, %45 : vector<1x1xf32>
      %47 = vector.shape_cast %46 : vector<1x1xf32> to vector<1x1xf32>
      %48 = vector.broadcast %47 : vector<1x1xf32> to vector<8x128xf32>
      %c0_27 = arith.constant 0 : index
      %c0_28 = arith.constant 0 : index
      %49 = vector.load %arg5[%c0_27, %c0_28] : memref<8x128xf32, #tpu.memory_space<vmem>>, vector<8x128xf32>
      tpu.vector_store %arg5[%c0_27, %c0_28], %48 {strides = array<i32>} : memref<8x128xf32, #tpu.memory_space<vmem>>, vector<8x128xf32>,
    } else {
    }
    return
  }
  func.func @transform_0(%arg0: i32, %arg1: i32) -> (i32, i32) {
    %c0_i32 = arith.constant 0 : i32
    %c0_i32_0 = arith.constant 0 : i32
    %c0_i32_1 = arith.constant 0 : i32
    return %c0_i32, %c0_i32_0 : i32, i32
  }
  func.func @transform_1(%arg0: i32, %arg1: i32) -> (i32, i32) {
    %c1_i32 = arith.constant 1 : i32
    %0 = arith.muli %arg0, %c1_i32 : i32
    %1 = arith.addi %0, %arg1 : i32
    %c0_i32 = arith.constant 0 : i32
    %2 = arith.minsi %1, %c0_i32 : i32
    %c0_i32_0 = arith.constant 0 : i32
    %c0_i32_1 = arith.constant 0 : i32
    return %2, %c0_i32_0 : i32, i32
  }
  func.func @transform_2(%arg0: i32, %arg1: i32) -> (i32, i32) {
    %c1_i32 = arith.constant 1 : i32
    %0 = arith.muli %arg0, %c1_i32 : i32
    %1 = arith.addi %0, %arg1 : i32
    %c0_i32 = arith.constant 0 : i32
    %c0_i32_0 = arith.constant 0 : i32
    return %1, %c0_i32 : i32, i32
  }
  func.func @transform_3(%arg0: i32, %arg1: i32) -> (i32, i32) {
    %c0_i32 = arith.constant 0 : i32
    %c0_i32_0 = arith.constant 0 : i32
    return %arg0, %c0_i32 : i32, i32
  }
}

</mosaic_0001>

<llo_original>
// kernel: tpu_custom_call.1
$region0: #{tpu_custom_call.1}
  #allocation0 [shape = 'u32[]', space=smem, size = 0x4, offset = 0x4, fixed_abs, tag = 'smem constant byte address 0x4 - core index']
  #allocation1 [shape = 'u32[72,128]{1,0:T(1,128)}', space=vmem, size = 0x9000, scoped, tag = 'internal scratch']
  #allocation2 [shape = 'f32[1,16]{1,0:T(1,128)}', space=vmem, size = 0x200, scoped, tag = 'scratch operand']
  #allocation3 [shape = 'f32[1,1]{1,0:T(1,128)}', space=vmem, size = 0x200, scoped, tag = 'scratch operand']
  %s0 = inlined_call_operand.vmem [shape: f32[1,16], index: 0, kind: input, shape index: {}]
  %s1 = inlined_call_operand.vmem [shape: f32[8,16], index: 1, kind: input, shape index: {}]
  %s2 = inlined_call_operand.vmem [shape: s32[8,1], index: 2, kind: input, shape index: {}]
  %s3 = inlined_call_operand.hbm [shape: f32[8,128], index: 3, kind: output, shape index: {}]
  %s4 = sld [smem:[#allocation0]]
  $region30: #{tpu_custom_call.1} parent=0
    _
  %s6 = ssub.s32 1, %s4
  %s7 = scalar_select 0, %s6, %s4
  $region1: #{tpu_custom_call.1} parent=0
    #allocation4 [shape = 'u8[4096]{0}', space=vmem, size = 0x1000, scoped, tag = 'output window, operand 0, single buffered']
    #allocation5 [shape = 's32[1]{0}', space=sflag, size = 0x4, scoped, tag = 'scoped memory for tpu_custom_call.1']
    %8 = vsyncpa [#allocation5], 0
    // Predicated region
    $region2: #{tpu_custom_call.1} parent=1 // pred_check
      _
    $region3: #{tpu_custom_call.1} parent=1 // pred_check_branch
      %10 = sbr.rel (0) target = $region5
    $region4: #{tpu_custom_call.1} parent=1 // pred_region
      _
    $region5: #{tpu_custom_call.1} parent=1 // pred_fallthru
      _
    // Predicated region
    $region6: #{tpu_custom_call.1} parent=1 // pred_check
      _
    $region7: #{tpu_custom_call.1} parent=1 // pred_check_branch
      %12 = sbr.rel (0) target = $region9
    $region8: #{tpu_custom_call.1} parent=1 // pred_region
      %s13 = sadd.s32 0, 0
      %p14 = scmp.lt.s32.totalorder %s13, 0
      %s15 = scalar_select %p14, %s13, 0
      %p16 = scmp.lt.s32.totalorder %s15, 0
      %s17 = scalar_select %p16, %s15, 0
      %s18 = smul.addr %s17, 8
      %s19 = scalar_lea.vmem %s1, %s18
      %s20 = sadd.s32 0, 0
      %p21 = scmp.lt.s32.totalorder %s20, 0
      %s22 = scalar_select %p21, %s20, 0
    $region9: #{tpu_custom_call.1} parent=1 // pred_fallthru
      _
    // Predicated region
    $region10: #{tpu_custom_call.1} parent=1 // pred_check
      _
    $region11: #{tpu_custom_call.1} parent=1 // pred_check_branch
      %24 = sbr.rel (0) target = $region13
    $region12: #{tpu_custom_call.1} parent=1 // pred_region
      %s25 = sadd.s32 0, 0
      %p26 = scmp.lt.s32.totalorder %s25, 0
      %s27 = scalar_select %p26, %s25, 0
      %s28 = smul.addr %s27, 8
      %s29 = scalar_lea.vmem %s2, %s28
      %s30 = sadd.s32 0, 0
    $region13: #{tpu_custom_call.1} parent=1 // pred_fallthru
      _
    %s31 = sadd.s32 0, 0
    %p32 = scmp.lt.s32.totalorder %s31, 0
    %s33 = scalar_select %p32, %s31, 0
    %p34 = scmp.lt.s32.totalorder %s33, 0
    %s35 = scalar_select %p34, %s33, 0
    %s36 = smul.addr %s35, 8
    %s37 = scalar_lea.vmem %s1, %s36
    %s38 = sadd.s32 0, 0
    %p39 = scmp.lt.s32.totalorder %s38, 0
    %s40 = scalar_select %p39, %s38, 0
    %s41 = smul.addr %s40, 8
    %s42 = scalar_lea.vmem %s2, %s41
    %s43 = sadd.s32 0, 0
    %p44 = scmp.lt.s32.totalorder %s43, 0
    %s45 = scalar_select %p44, %s43, 0
    %p46 = scmp.lt.s32.totalorder %s45, 0
    %s47 = scalar_select %p46, %s45, 0
    %s48 = smul.addr %s47, 8
    %s49 = scalar_lea.vmem %s1, %s48
    %s50 = sadd.s32 0, 0
    %p51 = scmp.lt.s32.totalorder %s50, 0
    %s52 = scalar_select %p51, %s50, 0
    %s53 = sadd.s32 0, 0
    %p54 = scmp.lt.s32.totalorder %s53, 0
    %s55 = scalar_select %p54, %s53, 0
    %s56 = smul.addr %s55, 8
    %s57 = scalar_lea.vmem %s2, %s56
    %s58 = sadd.s32 0, 0
    %p59 = scmp.eq.s32.totalorder 0, 0
    // Predicated region
    $region14: #{tpu_custom_call.1} parent=1 // pred_check
      %p60 = pneg %p59
    $region15: #{tpu_custom_call.1} parent=1 // pred_check_branch
      %62 = sbr.rel (%p60) target = $region17
    $region16: #{tpu_custom_call.1} parent=1 // pred_region
      %vm63 = vcmask 122880
      %64 = vst.msk [vmem:[#allocation2] sm:$0x1] %vm63, 0.0
      %vm65 = vcmask 0
      %66 = vst.msk [vmem:[#allocation3] sm:$0x1] %vm65, 0.0
    $region17: #{tpu_custom_call.1} parent=1 // pred_fallthru
      _
    %v67 = vld [vmem:[%s49] sm:$0xff]
    %v68 = vld [vmem:[%s0] sm:$0x1]
    %v70 = vperm.slane %v68, 0
    %v72 = vadd.f32 %v67, %v70
    %v73 = vld [vmem:[%s57] sm:$0xff]
    %vm74 = vcmp.ge.s32.totalorder %v73, 0
    %vm75 = vcmask 130048
    %v76 = vsel %vm75, %v72, -inf
    %77 = vmax.xlane.f32.xlu0 %v76
    %v78 = vpop.xlane.xlu0 %77
    %v79 = vsub.f32 %v72, %v78
    %v80 = vmul.f32 %v79, 1.442695
    %v81 = vpow.pop %v80
    %v82 = vsel %vm75, %v81, 0.0
    %83 = vadd.xlane.f32.xlu0 %v82
    %v84 = vpop.xlane.xlu0 %83
    %v85 = vlog2.pop %v84
    %v86 = vmul.f32 %v85, 0.6931472
    %v87 = vadd.f32 %v78, %v86
    %v88 = vsel %vm74, %v87, 0.0
    %v89 = vlaneseq
    %v90 = vand.u32 %v89, 127
    %91 = vset.pattern.permute.xlu0 0
    %92 = vperm.xlu0 %91, %v73
    %v93 = vpop.permute.xlu0 %92
    %vm94 = vcmp.eq.s32.totalorder %v90, %v93
    %v95 = vsel %vm94, %v72, 0.0
    %v96 = vld [vmem:[#allocation2] sm:$0x1]
    %v97 = vsel %vm75, %v95, 0.0
    %v98 = vrot.slane %v97, 4
    %v99 = vadd.f32 %v97, %v98
    %v100 = vrot.slane %v99, 2
    %v101 = vadd.f32 %v99, %v100
    %v102 = vrot.slane %v101, 1
    %v103 = vadd.f32 %v101, %v102
    %v104 = vadd.f32 %v96, %v103
    %vm105 = vcmask 122880
    %106 = vst.msk [vmem:[#allocation2] sm:$0x1] %vm105, %v104
    %v107 = vld [vmem:[#allocation3] sm:$0x1]
    %vm108 = vcmask 7168
    %v109 = vsel %vm108, %v88, 0.0
    %v110 = vrot.slane %v109, 4
    %v111 = vadd.f32 %v109, %v110
    %v112 = vrot.slane %v111, 2
    %v113 = vadd.f32 %v111, %v112
    %v114 = vrot.slane %v113, 1
    %v115 = vadd.f32 %v113, %v114
    %v116 = vadd.f32 %v107, %v115
    %vm117 = vcmask 0
    %118 = vst.msk [vmem:[#allocation3] sm:$0x1] %vm117, %v116
    // Predicated region
    $region18: #{tpu_custom_call.1} parent=1 // pred_check
      %p119 = pneg %p59
    $region19: #{tpu_custom_call.1} parent=1 // pred_check_branch
      %121 = sbr.rel (%p119) target = $region21
    $region20: #{tpu_custom_call.1} parent=1 // pred_region
      %v122 = vld [vmem:[#allocation3] sm:$0x1]
      %v123 = vld [vmem:[#allocation2] sm:$0x1]
      %v124 = vsel %vm105, %v123, 0.0
      %125 = vadd.xlane.f32.xlu0 %v124
      %v126 = vpop.xlane.xlu0 %125
      %v127 = vrot.slane %v126, 4
      %v128 = vadd.f32 %v126, %v127
      %v129 = vrot.slane %v128, 2
      %v130 = vadd.f32 %v128, %v129
      %v131 = vrot.slane %v130, 1
      %v132 = vadd.f32 %v130, %v131
      %s133 = vtos %v132
      %v134 = vstv %s133
      %v135 = vsub.f32 %v122, %v134
      %v137 = vperm.slane %v135, 0
      %138 = vset.pattern.permute.xlu0 0
      %139 = vperm.xlu0 %138, %v137
      %v140 = vpop.permute.xlu0 %139
      %142 = vst [vmem:[#allocation4] sm:$0xff] %v140
    $region21: #{tpu_custom_call.1} parent=1 // pred_fallthru
      _
    // Predicated region
    $region22: #{tpu_custom_call.1} parent=1 // pred_check
      _
    $region23: #{tpu_custom_call.1} parent=1 // pred_check_branch
      %144 = sbr.rel (0) target = $region25
    $region24: #{tpu_custom_call.1} parent=1 // pred_region
      %146 = vsyncadd [#allocation5], 0
      %s148 = sshll.u32 [#allocation4], 4
      %s149 = int_to_ptr.vmem [resolvable:$true] %s148
      %s150 = sshll.u32 %s3, 4
      %s151 = int_to_ptr.hbm [resolvable:$true] %s150
      %153 = dma.vmem_to_hbm [thread:$0]  %s149, 128, %s151, [#allocation5]
    $region25: #{tpu_custom_call.1} parent=1 // pred_fallthru
      _
    // Predicated region
    $region26: #{tpu_custom_call.1} parent=1 // pred_check
      _
    $region27: #{tpu_custom_call.1} parent=1 // pred_check_branch
      %155 = sbr.rel (0) target = $region29
    $region28: #{tpu_custom_call.1} parent=1 // pred_region
      %157 = dma.done [#allocation5], 128
    $region29: #{tpu_custom_call.1} parent=1 // pred_fallthru
      _
    %158 = vsyncpa [#allocation5], 1

</llo_original>
